<compile_context>
chip_gen: v7x
topology: tpu7x:2x2x1
jax: 0.10.0
libtpu: 0.0.40
codegen_flags: <defaults>
</compile_context>

<pallas_src>
import numpy as np
import jax
import jax.numpy as jnp
from jax import lax
from jax.experimental import pallas as pl
from jax.experimental.pallas import tpu as pltpu


def _round_up(a, b):
    return (a + b - 1) // b * b


def _choose_tile_m(M, cap=2048, min_tile=256):
    """Pick the M (= B * num_patches) tile size.

    Preference order:
      1. an exact divisor of M (no row padding -> no post-kernel slice copy),
         a multiple of 8, as large as possible up to `cap`, leaving >= 2 grid
         steps when M allows (so v7x's two TensorCores both get work);
      2. a single full-extent tile when M is small (always layout-legal);
      3. pad M up to a small number of ~cap-sized tiles otherwise.
    Returns (tile_m, row_padding).
    """
    if M <= cap:
        halves = [d for d in range(8, M // 2 + 1, 8) if M % d == 0]
        if halves:
            return max(halves), 0          # >= 2 exact tiles, multiple of 8
        return M, 0                        # one full-extent tile (always legal)
    divisors = [d for d in range(min_tile, cap + 1, 8) if M % d == 0]
    if divisors:
        return max(divisors), 0
    n_steps = -(-M // cap)                 # ceil(M / cap)
    tm = _round_up(-(-M // n_steps), 8)    # balanced tiles, minimal padding
    return tm, tm * n_steps - M


def _patch_embed_kernel(p_ref, w_ref, o_ref):
    # (tm, K) @ (K, width) on the MXU; bf16 operands, f32 accumulation,
    # stored in the (narrow) output dtype.
    o_ref[...] = jnp.dot(
        p_ref[...], w_ref[...], preferred_element_type=jnp.float32
    ).astype(o_ref.dtype)


def ast_tokenizer_forward(x, conv_w, pos_emb, *, fstride, tstride, patch_size,
                          out_dtype=jnp.bfloat16):
    """Pallas implementation of AST_tokenizer.forward.

    x:       (B, input_tdim, input_fdim)  float32
    conv_w:  (width, 1, kh, kw)           float32  (nn.Conv2d weight, bias-free)
    pos_emb: (num_patches, width)         float32
    returns: {'x': (B, num_patches, width) out_dtype, 'pos': pos_emb}

    Numerics: operands are rounded to bf16 and the result is stored in
    `out_dtype` (default bf16); accumulation is f32 on the MXU.
    """
    B, T, F = x.shape
    kh, kw = patch_size
    width = conv_w.shape[0]

    fdim = (F - kh) // fstride + 1
    tdim = (T - kw) // tstride + 1
    num_patches = fdim * tdim
    K = kh * kw
    M = B * num_patches

    # Cast to bf16 up front: if the im2col intermediate does materialize, it
    # is written and re-read at half width.
    xft = jnp.transpose(x.astype(jnp.bfloat16), (0, 2, 1))  # (B, F, T) == NCHW view

    if fstride == kh and tstride == kw:
        # Non-overlapping patches: im2col is a pure slice/reshape/transpose.
        # allow_input_fusion below lets XLA fold this producer chain into the
        # pallas_call input DMA instead of materializing `patches` in HBM.
        xc = xft[:, : fdim * kh, : tdim * kw]
        patches = xc.reshape(B, fdim, kh, tdim, kw)
        patches = jnp.transpose(patches, (0, 1, 3, 2, 4))   # (B, fdim, tdim, kh, kw)
        patches = patches.reshape(M, K)
    else:
        # TODO(synk): for the canonical overlapping AST config (e.g. stride 10
        # with 16x16 patches) replace this XLA-gather im2col with in-kernel
        # windowed DMA that reuses overlapping rows in VMEM.
        f_idx = (np.arange(fdim) * fstride)[:, None] + np.arange(kh)[None, :]
        t_idx = (np.arange(tdim) * tstride)[:, None] + np.arange(kw)[None, :]
        patches = xft[:, f_idx[:, None, :, None], t_idx[None, :, None, :]]
        patches = patches.reshape(M, K)

    # Conv2d weight (width, 1, kh, kw) -> (K, width) matmul operand (k = fh*kw + tw).
    w_mat = conv_w.reshape(width, K).T.astype(jnp.bfloat16)

    tm, row_pad = _choose_tile_m(M)
    if row_pad:
        patches = jnp.pad(patches, ((0, row_pad), (0, 0)))
    m_total = M + row_pad
    grid_m = m_total // tm

    out_bytes = np.dtype(out_dtype).itemsize
    cost = pl.CostEstimate(
        flops=2 * m_total * K * width,
        transcendentals=0,
        bytes_accessed=m_total * K * 2 + K * width * 2 + m_total * width * out_bytes,
    )

    out = pl.pallas_call(
        _patch_embed_kernel,
        out_shape=jax.ShapeDtypeStruct((m_total, width), out_dtype),
        grid=(grid_m,),
        in_specs=[
            pl.BlockSpec((tm, K), lambda i: (i, 0)),     # patch-row tiles, pipelined
            pl.BlockSpec((K, width), lambda i: (0, 0)),  # small weight, block-invariant
        ],
        # Full-width output blocks: no column padding and no post-kernel slice.
        out_specs=pl.BlockSpec((tm, width), lambda i: (i, 0)),
        compiler_params=pltpu.CompilerParams(
            dimension_semantics=("parallel",),           # v7x: split M tiles across TCs
            allow_input_fusion=[True, False],            # fold im2col into input pipeline
        ),
        cost_estimate=cost,
    )(patches, w_mat)

    tokens = out if row_pad == 0 else out[:M]
    tokens = tokens.reshape(B, num_patches, width)       # free reshape (contiguous)
    return {"x": tokens, "pos": pos_emb}


if __name__ == "__main__":
    # Small but representative config: non-overlapping 16x16 patches,
    # lane-dense width, M = 32 -> two grid tiles of 16 rows.
    fstride, tstride = 16, 16
    input_fdim, input_tdim = 32, 128
    patch_size = (16, 16)
    width = 128
    B = 2

    fdim = (input_fdim - patch_size[0]) // fstride + 1
    tdim = (input_tdim - patch_size[1]) // tstride + 1
    num_patches = fdim * tdim

    key = jax.random.PRNGKey(0)
    k_x, k_w, k_pos = jax.random.split(key, 3)
    x = jax.random.normal(k_x, (B, input_tdim, input_fdim), dtype=jnp.float32)
    conv_w = 0.02 * jax.random.normal(
        k_w, (width, 1, patch_size[0], patch_size[1]), dtype=jnp.float32)
    pos_emb = (width ** -0.5) * jax.random.normal(
        k_pos, (num_patches, width), dtype=jnp.float32)

    fwd = jax.jit(lambda a, b, c: ast_tokenizer_forward(
        a, b, c, fstride=fstride, tstride=tstride, patch_size=patch_size))
    out = fwd(x, conv_w, pos_emb)
    tokens = jax.block_until_ready(out["x"])
    pos = jax.block_until_ready(out["pos"])

    assert tokens.shape == (B, num_patches, width)
    assert tokens.dtype == jnp.bfloat16
    assert pos.shape == (num_patches, width)

    # Reference 1: full-f32 conv with PyTorch-equivalent semantics (NCHW).
    xft_ref = jnp.transpose(x, (0, 2, 1))[:, None]            # (B, 1, F, T)
    ref = lax.conv_general_dilated(
        xft_ref, conv_w, window_strides=(fstride, tstride), padding="VALID")
    ref_tokens = jnp.transpose(ref.reshape(B, width, -1), (0, 2, 1))

    # Reference 2: identical bf16 rounding of inputs and output, f32 conv math
    # (tight check on the kernel itself; only accumulation order differs).
    xft_bf = xft_ref.astype(jnp.bfloat16).astype(jnp.float32)
    w_bf = conv_w.astype(jnp.bfloat16).astype(jnp.float32)
    ref_bf = lax.conv_general_dilated(
        xft_bf, w_bf, window_strides=(fstride, tstride), padding="VALID")
    ref_tokens_bf = jnp.transpose(ref_bf.reshape(B, width, -1), (0, 2, 1))
    ref_tokens_bf = ref_tokens_bf.astype(jnp.bfloat16).astype(jnp.float32)

    tok = np.asarray(tokens.astype(jnp.float32))
    # bf16-in / f32-accum / bf16-out kernel vs full-f32 reference: loose tolerance.
    np.testing.assert_allclose(tok, np.asarray(ref_tokens), rtol=2e-2, atol=2e-2)
    # vs identically-rounded reference: differences are ~1 bf16 ulp at most.
    np.testing.assert_allclose(tok, np.asarray(ref_tokens_bf), rtol=2e-2, atol=2e-2)
    print("KERNEL_OK")
</pallas_src>

<mosaic_0001>
module attributes {stable_mosaic.version = 11 : i64} {
  func.func @_patch_embed_kernel(%arg0: i32, %arg1: memref<16x256xbf16, #tpu.memory_space<vmem>>, %arg2: memref<256x128xbf16, #tpu.memory_space<vmem>>, %arg3: memref<16x128xbf16, #tpu.memory_space<vmem>>) attributes {dimension_semantics = [#tpu.dimension_semantics<parallel>], iteration_bounds = array<i64: 2>, scalar_prefetch = 0 : i64, scratch_operands = 0 : i64, tpu.core_type = #tpu.core_type<tc>, window_params = [{transform_indices = @transform_0, window_bounds = array<i64: 16, 256>}, {pipeline_mode = #tpu.pipeline_mode<synchronous>, transform_indices = @transform_1, window_bounds = array<i64: 256, 128>}, {transform_indices = @transform_2, window_bounds = array<i64: 16, 128>}]} {
    %c0 = arith.constant 0 : index
    %c0_0 = arith.constant 0 : index
    %0 = vector.load %arg1[%c0, %c0_0] : memref<16x256xbf16, #tpu.memory_space<vmem>>, vector<16x256xbf16>
    %c0_1 = arith.constant 0 : index
    %c0_2 = arith.constant 0 : index
    %1 = vector.load %arg2[%c0_1, %c0_2] : memref<256x128xbf16, #tpu.memory_space<vmem>>, vector<256x128xbf16>
    %cst = arith.constant dense<0.000000e+00> : vector<16x128xf32>
    %2 = tpu.matmul %0, %1, %cst {dimension_numbers = #tpu.dot_dimension_numbers<[1], [0], [0], [1], [0, 0, 1, 1], [], []>} : vector<16x256xbf16>, vector<256x128xbf16>, vector<16x128xf32> -> vector<16x128xf32>
    %3 = arith.truncf %2 : vector<16x128xf32> to vector<16x128xbf16>
    %c0_3 = arith.constant 0 : index
    %c0_4 = arith.constant 0 : index
    %4 = vector.load %arg3[%c0_3, %c0_4] : memref<16x128xbf16, #tpu.memory_space<vmem>>, vector<16x128xbf16>
    tpu.vector_store %arg3[%c0_3, %c0_4], %3 {strides = array<i32>} : memref<16x128xbf16, #tpu.memory_space<vmem>>, vector<16x128xbf16>,
    return
  }
  func.func @transform_0(%arg0: i32) -> (i32, i32) {
    %c0_i32 = arith.constant 0 : i32
    %c0_i32_0 = arith.constant 0 : i32
    return %arg0, %c0_i32 : i32, i32
  }
  func.func @transform_1(%arg0: i32) -> (i32, i32) {
    %c0_i32 = arith.constant 0 : i32
    %c0_i32_0 = arith.constant 0 : i32
    %c0_i32_1 = arith.constant 0 : i32
    return %c0_i32, %c0_i32_0 : i32, i32
  }
  func.func @transform_2(%arg0: i32) -> (i32, i32) {
    %c0_i32 = arith.constant 0 : i32
    %c0_i32_0 = arith.constant 0 : i32
    return %arg0, %c0_i32 : i32, i32
  }
}

</mosaic_0001>

<llo_original>
// kernel: _lambda_.1
$region0: #{_lambda_.1}
  #allocation0 [shape = 'u32[]', space=smem, size = 0x4, offset = 0x4, fixed_abs, tag = 'smem constant byte address 0x4 - core index']
  #allocation1 [shape = 'u32[144,128]{1,0:T(1,128)}', space=vmem, size = 0x12000, scoped, tag = 'internal scratch']
  %s0 = inlined_call_operand.vmem [shape: bf16[32,256], index: 0, kind: input, shape index: {}]
  %s1 = inlined_call_operand.vmem [shape: bf16[256,128], index: 1, kind: input, shape index: {}]
  %s2 = inlined_call_operand.hbm [shape: bf16[32,128], index: 2, kind: output, shape index: {}]
  %s3 = sld [smem:[#allocation0]]
  $region41: #{_lambda_.1} parent=0
    _
  %s5 = ssub.s32 1, %s3
  %s6 = scalar_select 0, %s5, %s3
  $region1: #{_lambda_.1} parent=0
    #allocation2 [shape = 'u8[8192]{0}', space=vmem, size = 0x2000, scoped, tag = 'output window, operand 0']
    #allocation3 [shape = 's32[2]{0}', space=sflag, size = 0x8, scoped, tag = 'scoped memory for _lambda_.1']
    %7 = vsyncpa [#allocation3], 0
    %s8 = scalar_lea.sflag [#allocation3], 1
    %9 = vsyncpa %s8, 0
    loop: start=0, step=1, limit=4
    $region2: #{_lambda_.1} parent=1 // loop_pre_header
      _
    $region3: #{_lambda_.1} parent=1 // loop_header
      %s11 = sphi 0, %s15
      %p12 = scmp.ge.s32.totalorder %s11, 4
      %s21 = sphi 0, %s23
      %s24 = sphi 0, %s21
      %s25 = sphi 0, %s24
      %s41 = sphi 0, %s25
      %s45 = sphi 0, %s45
      %s47 = sphi 0, %s45
      %s48 = sphi 0, %s47
      %s62 = sphi 0, %s48
      %s68 = sphi 0, %s70
      %s71 = sphi 0, %s68
      %s72 = sphi 0, %s71
      %s88 = sphi 0, %s72
    $region4: #{_lambda_.1} parent=1 // loop_header_branch
      %14 = sbr.rel (%p12) target = $region8
    $region5: #{_lambda_.1} parent=1 // loop_body
      %s16 = ssub.s32 %s11, 1
      %s17 = ssub.s32 %s11, 2
      %s18 = sadd.s32 %s11, 1
      %s19 = ssub.s32 %s11, %s18
      %p20 = scmp.eq.s32.totalorder %s19, 0
      %s22 = sadd.s32 %s21, 1
      %s23 = scalar_select %p20, %s21, %s22
      %p26 = pneg %p20
      %p27 = scmp.eq.s32.totalorder %s11, 1
      %p28 = por %p26, %p27
      %p29 = scmp.ne.s32.totalorder %s21, %s24
      %p30 = scmp.eq.s32.totalorder %s11, 0
      %p31 = por %p29, %p30
      %p32 = scmp.ne.s32.totalorder %s21, %s24
      %p33 = scmp.eq.s32.totalorder %s16, 1
      %p34 = por %p32, %p33
      %p35 = scmp.ne.s32.totalorder %s24, %s25
      %p36 = scmp.eq.s32.totalorder %s16, 0
      %p37 = por %p35, %p36
      %p38 = scmp.ne.s32.totalorder %s24, %s25
      %p39 = scmp.eq.s32.totalorder %s17, 1
      %p40 = por %p38, %p39
      %p42 = scmp.ne.s32.totalorder %s25, %s41
      %p43 = scmp.eq.s32.totalorder %s17, 0
      %p44 = por %p42, %p43
      %s46 = sadd.s32 %s45, 1
      %p49 = scmp.eq.s32.totalorder %s11, 1
      %p50 = scmp.ne.s32.totalorder %s45, %s47
      %p51 = scmp.eq.s32.totalorder %s11, 0
      %p52 = por %p50, %p51
      %p53 = scmp.ne.s32.totalorder %s45, %s47
      %p54 = scmp.eq.s32.totalorder %s16, 1
      %p55 = por %p53, %p54
      %p56 = scmp.ne.s32.totalorder %s47, %s48
      %p57 = scmp.eq.s32.totalorder %s16, 0
      %p58 = por %p56, %p57
      %p59 = scmp.ne.s32.totalorder %s47, %s48
      %p60 = scmp.eq.s32.totalorder %s17, 1
      %p61 = por %p59, %p60
      %p63 = scmp.ne.s32.totalorder %s48, %s62
      %p64 = scmp.eq.s32.totalorder %s17, 0
      %p65 = por %p63, %p64
      %s66 = ssub.s32 %s11, %s18
      %p67 = scmp.eq.s32.totalorder %s66, 0
      %s69 = sadd.s32 %s68, 1
      %s70 = scalar_select %p67, %s68, %s69
      %p73 = pneg %p67
      %p74 = scmp.eq.s32.totalorder %s11, 1
      %p75 = por %p73, %p74
      %p76 = scmp.ne.s32.totalorder %s68, %s71
      %p77 = scmp.eq.s32.totalorder %s11, 0
      %p78 = por %p76, %p77
      %p79 = scmp.ne.s32.totalorder %s68, %s71
      %p80 = scmp.eq.s32.totalorder %s16, 1
      %p81 = por %p79, %p80
      %p82 = scmp.ne.s32.totalorder %s71, %s72
      %p83 = scmp.eq.s32.totalorder %s16, 0
      %p84 = por %p82, %p83
      %p85 = scmp.ne.s32.totalorder %s71, %s72
      %p86 = scmp.eq.s32.totalorder %s17, 1
      %p87 = por %p85, %p86
      %p89 = scmp.ne.s32.totalorder %s72, %s88
      %p90 = scmp.eq.s32.totalorder %s17, 0
      %p91 = por %p89, %p90
      %p92 = scmp.le.s32.totalorder 1, %s11
      %p93 = scmp.lt.s32.totalorder %s11, 3
      %p94 = pnand %p92, %p93
      %p95 = pneg %p94
      // Predicated region
      $region9: #{_lambda_.1} parent=5 // pred_check
        _
      $region10: #{_lambda_.1} parent=5 // pred_check_branch
        %97 = sbr.rel (%p94) target = $region12
      $region11: #{_lambda_.1} parent=5 // pred_region
        %s98 = ssub.s32 %s11, 1
        // Predicated region
        $region13: #{_lambda_.1} parent=11 // pred_check
          %p99 = pneg %p58
        $region14: #{_lambda_.1} parent=11 // pred_check_branch
          %101 = sbr.rel (%p99) target = $region16
        $region15: #{_lambda_.1} parent=11 // pred_region
          _
        $region16: #{_lambda_.1} parent=11 // pred_fallthru
          _
      $region12: #{_lambda_.1} parent=5 // pred_fallthru
        _
      %p102 = scmp.lt.s32.totalorder %s11, 2
      // Predicated region
      $region17: #{_lambda_.1} parent=5 // pred_check
        %p103 = pneg %p102
      $region18: #{_lambda_.1} parent=5 // pred_check_branch
        %105 = sbr.rel (%p103) target = $region20
      $region19: #{_lambda_.1} parent=5 // pred_region
        // Predicated region
        $region21: #{_lambda_.1} parent=19 // pred_check
          %p106 = pneg %p31
        $region22: #{_lambda_.1} parent=19 // pred_check_branch
          %108 = sbr.rel (%p106) target = $region24
        $region23: #{_lambda_.1} parent=19 // pred_region
          %s109 = smul.u32 2, %s11
          %p110 = scmp.lt.s32.totalorder %s109, 3
          %s111 = scalar_select %p110, %s109, 3
          %s112 = smul.addr %s111, 2
          %s113 = smul.addr %s112, 4
          %s114 = scalar_lea.vmem %s0, %s113
          %s115 = smul.u32 2, %s11
        $region24: #{_lambda_.1} parent=19 // pred_fallthru
          _
      $region20: #{_lambda_.1} parent=5 // pred_fallthru
        _
      %p116 = scmp.le.s32.totalorder 1, %s11
      %p117 = scmp.lt.s32.totalorder %s11, 3
      %p118 = pnand %p116, %p117
      %p119 = pneg %p118
      // Predicated region
      $region25: #{_lambda_.1} parent=5 // pred_check
        _
      $region26: #{_lambda_.1} parent=5 // pred_check_branch
        %121 = sbr.rel (%p118) target = $region28
      $region27: #{_lambda_.1} parent=5 // pred_region
        %s122 = ssub.s32 %s11, 1
        %s123 = smul.u32 2, %s16
        %p124 = scmp.lt.s32.totalorder %s123, 3
        %s125 = scalar_select %p124, %s123, 3
        %s126 = smul.addr %s125, 2
        %s127 = smul.addr %s126, 4
        %s128 = scalar_lea.vmem %s0, %s127
        %p129 = pneg %p37
        %p130 = pneg %p34
        %p131 = pneg %p58
        %p132 = pneg %p55
        %p133 = pneg %p84
        %p134 = pneg %p81
        %s135 = sand.u32 %s71, 1
        %s136 = scalar_lea.sflag [#allocation3], %s135
        %s137 = sand.u32 %s71, 1
        %s138 = smul.addr %s137, 8
        %s139 = scalar_lea.vmem [#allocation2], %s138
        %s140 = smul.u32 2, %s16
        %p141 = scmp.lt.s32.totalorder %s140, 3
        %s142 = scalar_select %p141, %s140, 3
        %s143 = smul.addr %s142, 2
        %s144 = smul.addr %s143, 4
        %s145 = scalar_lea.vmem %s0, %s144
        %s146 = smul.u32 2, %s16
        %s147 = smul.u32 2, %s16
        %v149 = vld [vmem:[%s145] sm:$0xff]
        %v150 = vld [vmem:[%s145 + $0x8] sm:$0xff]
        %v151 = vld [vmem:[%s1] sm:$0xf]
        %v152 = vld [vmem:[%s1 + $0x4] sm:$0xf]
        %v153 = vld [vmem:[%s1 + $0x8] sm:$0xf]
        %v154 = vld [vmem:[%s1 + $0xc] sm:$0xf]
        %v155 = vld [vmem:[%s1 + $0x10] sm:$0xf]
        %v156 = vld [vmem:[%s1 + $0x14] sm:$0xf]
        %v157 = vld [vmem:[%s1 + $0x18] sm:$0xf]
        %v158 = vld [vmem:[%s1 + $0x1c] sm:$0xf]
        %v159 = vld [vmem:[%s1 + $0x20] sm:$0xf]
        %v160 = vld [vmem:[%s1 + $0x24] sm:$0xf]
        %v161 = vld [vmem:[%s1 + $0x28] sm:$0xf]
        %v162 = vld [vmem:[%s1 + $0x2c] sm:$0xf]
        %v163 = vld [vmem:[%s1 + $0x30] sm:$0xf]
        %v164 = vld [vmem:[%s1 + $0x34] sm:$0xf]
        %v165 = vld [vmem:[%s1 + $0x38] sm:$0xf]
        %v166 = vld [vmem:[%s1 + $0x3c] sm:$0xf]
        %v167 = vld [vmem:[%s1 + $0x40] sm:$0xf]
        %v168 = vld [vmem:[%s1 + $0x44] sm:$0xf]
        %v169 = vld [vmem:[%s1 + $0x48] sm:$0xf]
        %v170 = vld [vmem:[%s1 + $0x4c] sm:$0xf]
        %v171 = vld [vmem:[%s1 + $0x50] sm:$0xf]
        %v172 = vld [vmem:[%s1 + $0x54] sm:$0xf]
        %v173 = vld [vmem:[%s1 + $0x58] sm:$0xf]
        %v174 = vld [vmem:[%s1 + $0x5c] sm:$0xf]
        %v175 = vld [vmem:[%s1 + $0x60] sm:$0xf]
        %v176 = vld [vmem:[%s1 + $0x64] sm:$0xf]
        %v177 = vld [vmem:[%s1 + $0x68] sm:$0xf]
        %v178 = vld [vmem:[%s1 + $0x6c] sm:$0xf]
        %v179 = vld [vmem:[%s1 + $0x70] sm:$0xf]
        %v180 = vld [vmem:[%s1 + $0x74] sm:$0xf]
        %v181 = vld [vmem:[%s1 + $0x78] sm:$0xf]
        %v182 = vld [vmem:[%s1 + $0x7c] sm:$0xf]
        %v185 = vunpack.c.l.b16 %v149
        %v186 = vunpack.c.h.b16 %v149
        %v187 = vunpack.c.l.b16 %v150
        %v188 = vunpack.c.h.b16 %v150
        %v189 = vpack.c.b16 %v187, %v185
        %v190 = vpack.c.b16 %v188, %v186
        %v225 = vunpack.c.l.b16 %v151
        %v226 = vunpack.c.l.b16 %v152
        %v227 = vunpack.c.l.b16 %v153
        %v228 = vunpack.c.l.b16 %v154
        %v229 = vunpack.c.l.b16 %v155
        %v230 = vunpack.c.l.b16 %v156
        %v231 = vunpack.c.l.b16 %v157
        %v232 = vunpack.c.l.b16 %v158
        %v233 = vunpack.c.l.b16 %v159
        %v234 = vunpack.c.l.b16 %v160
        %v235 = vunpack.c.l.b16 %v161
        %v236 = vunpack.c.l.b16 %v162
        %v237 = vunpack.c.l.b16 %v163
        %v238 = vunpack.c.l.b16 %v164
        %v239 = vunpack.c.l.b16 %v165
        %v240 = vunpack.c.l.b16 %v166
        %v241 = vunpack.c.l.b16 %v167
        %v242 = vunpack.c.l.b16 %v168
        %v243 = vunpack.c.l.b16 %v169
        %v244 = vunpack.c.l.b16 %v170
        %v245 = vunpack.c.l.b16 %v171
        %v246 = vunpack.c.l.b16 %v172
        %v247 = vunpack.c.l.b16 %v173
        %v248 = vunpack.c.l.b16 %v174
        %v249 = vunpack.c.l.b16 %v175
        %v250 = vunpack.c.l.b16 %v176
        %v251 = vunpack.c.l.b16 %v177
        %v252 = vunpack.c.l.b16 %v178
        %v253 = vunpack.c.l.b16 %v179
        %v254 = vunpack.c.l.b16 %v180
        %v255 = vunpack.c.l.b16 %v181
        %v256 = vunpack.c.l.b16 %v182
        %v257 = vpack.c.b16 %v226, %v225
        %v258 = vpack.c.b16 %v228, %v227
        %v259 = vpack.c.b16 %v230, %v229
        %v260 = vpack.c.b16 %v232, %v231
        %v261 = vpack.c.b16 %v234, %v233
        %v262 = vpack.c.b16 %v236, %v235
        %v263 = vpack.c.b16 %v238, %v237
        %v264 = vpack.c.b16 %v240, %v239
        %v265 = vpack.c.b16 %v242, %v241
        %v266 = vpack.c.b16 %v244, %v243
        %v267 = vpack.c.b16 %v246, %v245
        %v268 = vpack.c.b16 %v248, %v247
        %v269 = vpack.c.b16 %v250, %v249
        %v270 = vpack.c.b16 %v252, %v251
        %v271 = vpack.c.b16 %v254, %v253
        %v272 = vpack.c.b16 %v256, %v255
        %289 = vmatprep.subr.bf16.mxu0 0
        %290 = vmatpush1.bf16.msra.mxu0 %v257
        %291 = vmatprep.subr.bf16.mxu0 0
        %292 = vmatpush1.bf16.msra.mxu0 %v258
        %293 = vmatprep.subr.bf16.mxu0 0
        %294 = vmatpush1.bf16.msra.mxu0 %v259
        %295 = vmatprep.subr.bf16.mxu0 0
        %296 = vmatpush1.bf16.msra.mxu0 %v260
        %297 = vmatprep.subr.bf16.mxu0 0
        %298 = vmatpush1.bf16.msra.mxu0 %v261
        %299 = vmatprep.subr.bf16.mxu0 0
        %300 = vmatpush1.bf16.msra.mxu0 %v262
        %301 = vmatprep.subr.bf16.mxu0 0
        %302 = vmatpush1.bf16.msra.mxu0 %v263
        %303 = vmatprep.subr.bf16.mxu0 0
        %304 = vmatpush1.bf16.msra.mxu0 %v264
        %305 = vmatprep.subr.bf16.mxu0 0
        %306 = vmatpush1.bf16.msra.mxu0 %v265
        %307 = vmatprep.subr.bf16.mxu0 0
        %308 = vmatpush1.bf16.msra.mxu0 %v266
        %309 = vmatprep.subr.bf16.mxu0 0
        %310 = vmatpush1.bf16.msra.mxu0 %v267
        %311 = vmatprep.subr.bf16.mxu0 0
        %312 = vmatpush1.bf16.msra.mxu0 %v268
        %313 = vmatprep.subr.bf16.mxu0 0
        %314 = vmatpush1.bf16.msra.mxu0 %v269
        %315 = vmatprep.subr.bf16.mxu0 0
        %316 = vmatpush1.bf16.msra.mxu0 %v270
        %317 = vmatprep.subr.bf16.mxu0 0
        %318 = vmatpush1.bf16.msra.mxu0 %v271
        %319 = vmatprep.subr.bf16.mxu0 0
        %320 = vmatpush1.bf16.msra.mxu0 %v272
        %321 = vmatprep.mubr.bf16.mxu0 %v190
        %322 = vmatmul.mubr.bf16.gmra.mrb[0].mxu0 %v189
        %v323 = vpop.f32.mrb[0].mxu0
        %v324 = vadd.f32 0.0, %v323
        %v325 = vpop.f32.mrb[0].mxu0
        %v326 = vpop.f32.mrb[0].mxu0
        %v327 = vadd.f32 0.0, %v326
        %v328 = vpop.f32.mrb[0].mxu0
        %329 = vdwg.mxu0
        %v330 = vpack.c.bf16 %v327, %v324
        %v332 = vunpack.c.l.b16 %v330
        %v333 = vunpack.c.h.b16 %v330
        %v334 = vpack.c.b16 %v332, %v332
        %v335 = vpack.c.b16 %v333, %v333
        %338 = vst [vmem:[%s139] sm:$0xf] %v334
        %339 = vst [vmem:[%s139 + $0x4] sm:$0xf] %v335
        %s340 = sand.u32 %s71, 1
        %s341 = scalar_lea.sflag [#allocation3], %s340
        %s342 = sand.u32 %s71, 1
        %s343 = smul.addr %s342, 8
        %s344 = scalar_lea.vmem [#allocation2], %s343
        // Predicated region
        $region29: #{_lambda_.1} parent=27 // pred_check
          %p345 = pneg %p81
        $region30: #{_lambda_.1} parent=27 // pred_check_branch
          %347 = sbr.rel (%p345) target = $region32
        $region31: #{_lambda_.1} parent=27 // pred_region
          %s348 = smul.u32 2, %s16
          %s350 = ssub.s32 128, 128
          %351 = vsyncadd %s341, %s350
          %s352 = smul.addr %s348, 64
          %s353 = scalar_lea.hbm %s2, %s352
          %s354 = sshll.u32 %s344, 4
          %s355 = int_to_ptr.vmem [resolvable:$true] %s354
          %360 = dma.vmem_to_hbm [thread:$0]  %s355, 128, %s353, %s341, 64, 64, 4
        $region32: #{_lambda_.1} parent=27 // pred_fallthru
          _
      $region28: #{_lambda_.1} parent=5 // pred_fallthru
        _
      %p361 = scmp.le.s32.totalorder 2, %s11
      // Predicated region
      $region33: #{_lambda_.1} parent=5 // pred_check
        %p362 = pneg %p361
      $region34: #{_lambda_.1} parent=5 // pred_check_branch
        %364 = sbr.rel (%p362) target = $region36
      $region35: #{_lambda_.1} parent=5 // pred_region
        %s365 = ssub.s32 %s11, 2
        // Predicated region
        $region37: #{_lambda_.1} parent=35 // pred_check
          %p366 = pneg %p87
        $region38: #{_lambda_.1} parent=35 // pred_check_branch
          %368 = sbr.rel (%p366) target = $region40
        $region39: #{_lambda_.1} parent=35 // pred_region
          %s369 = sand.u32 %s72, 1
          %s370 = scalar_lea.sflag [#allocation3], %s369
          %s371 = sand.u32 %s72, 1
          %s372 = smul.addr %s371, 8
          %s373 = scalar_lea.vmem [#allocation2], %s372
          %374 = dma.done %s370, 128
        $region40: #{_lambda_.1} parent=35 // pred_fallthru
          _
      $region36: #{_lambda_.1} parent=5 // pred_fallthru
        _
    $region6: #{_lambda_.1} parent=1 // loop_footer
      %s15 = sadd.s32 1, %s11
    $region7: #{_lambda_.1} parent=1 // loop_footer_branch
      %10 = sbr.rel target = $region3
    $region8: #{_lambda_.1} parent=1 // loop_exit
      _
    %375 = vsyncpa [#allocation3], 1
    %s376 = scalar_lea.sflag [#allocation3], 1
    %377 = vsyncpa %s376, 1

</llo_original>
